<compile_context>
chip_gen: v6e
topology: v6e:2x2x1
jax: 0.10.0
libtpu: 0.0.40
codegen_flags: <defaults>
</compile_context>

<pallas_src>
import functools
import math

import jax
import jax.numpy as jnp
from jax.experimental import pallas as pl
from jax.experimental.pallas import tpu as pltpu

F_PAD = 128  # lane-dense padded feature width


def _round_up(x, m):
    return (x + m - 1) // m * m


# ------------- Pass 1 kernel: O = relu(A @ H + b1) @ W2  (fused epilogue) ----
def _layer1_kernel(a_ref, h_ref, b1_ref, w2_ref, o_ref, acc_ref):
    k = pl.program_id(1)

    @pl.when(k == 0)
    def _():
        acc_ref[...] = jnp.zeros_like(acc_ref)

    a = a_ref[...].astype(jnp.float32)  # bf16 tile -> f32 (f32 accumulation)
    acc_ref[...] += jnp.dot(a, h_ref[...], preferred_element_type=jnp.float32)

    @pl.when(k == pl.num_programs(1) - 1)
    def _():
        h1 = jnp.maximum(acc_ref[...] + b1_ref[...], 0.0)      # ReLU(A@XW1 + b1)
        # h1 @ W2 done once per row tile (hoisted out of the K loop).
        o_ref[...] = jnp.dot(h1, w2_ref[...], preferred_element_type=jnp.float32)


# ------------- Pass 2 kernel: O = log_softmax(A @ G + b2) --------------------
def _layer2_kernel(a_ref, g_ref, b2_ref, o_ref, acc_ref, *, num_classes):
    k = pl.program_id(1)

    @pl.when(k == 0)
    def _():
        acc_ref[...] = jnp.zeros_like(acc_ref)

    a = a_ref[...].astype(jnp.float32)
    acc_ref[...] += jnp.dot(a, g_ref[...], preferred_element_type=jnp.float32)

    @pl.when(k == pl.num_programs(1) - 1)
    def _():
        h2 = acc_ref[...] + b2_ref[...]
        col = jax.lax.broadcasted_iota(jnp.int32, h2.shape, 1)
        valid = col < num_classes
        hm = jnp.where(valid, h2, -1e30)                        # mask padded lanes
        m = jnp.max(hm, axis=1, keepdims=True)
        s = hm - m
        lse = jnp.log(jnp.sum(jnp.exp(s), axis=1, keepdims=True))
        o_ref[...] = jnp.where(valid, s - lse, 0.0)


def _agg_pass(kernel, a_p, h_p, residents, *, n_pad, tm, tk, transcendentals=0):
    """One tiled reduction pass computing an (n_pad, F_PAD) epilogue(A @ H)."""
    grid = (n_pad // tm, n_pad // tk)
    resident_specs = [pl.BlockSpec(r.shape, lambda i, k: (0, 0)) for r in residents]
    flops = 2 * n_pad * n_pad * F_PAD + 2 * n_pad * F_PAD * F_PAD
    bytes_accessed = (n_pad * n_pad * 2            # bf16 adjacency stream
                      + 2 * n_pad * F_PAD * 4      # feature in + out
                      + sum(int(r.size) * 4 for r in residents))
    return pl.pallas_call(
        kernel,
        out_shape=jax.ShapeDtypeStruct((n_pad, F_PAD), jnp.float32),
        grid_spec=pltpu.PrefetchScalarGridSpec(
            num_scalar_prefetch=0,
            grid=grid,
            in_specs=[
                pl.BlockSpec((tm, tk), lambda i, k: (i, k)),     # A tile (bf16)
                pl.BlockSpec((tk, F_PAD), lambda i, k: (k, 0)),  # feature tile
                *resident_specs,                                 # small residents
            ],
            out_specs=pl.BlockSpec((tm, F_PAD), lambda i, k: (i, 0)),
            scratch_shapes=[pltpu.VMEM((tm, F_PAD), jnp.float32)],
        ),
        compiler_params=pltpu.CompilerParams(
            dimension_semantics=("parallel", "arbitrary"),
            vmem_limit_bytes=48 * 1024 * 1024,   # safe on v5e/v6e (128 MiB) and v7x (64 MiB)
        ),
        cost_estimate=pl.CostEstimate(
            flops=flops,
            transcendentals=transcendentals,
            bytes_accessed=bytes_accessed),
    )(a_p, h_p, *residents)


def gcn_forward(a_hat, x, w1, b1, w2, b2, *, tm=256, tk=512):
    """Full GCN forward. a_hat: (N, N) normalized adjacency (any float dtype)."""
    assert tm % 8 == 0 and tk % 128 == 0, "tiles must respect the (8,128) rule"
    n = x.shape[0]
    hid = w1.shape[1]
    f_out = w2.shape[1]
    assert hid <= F_PAD and f_out <= F_PAD

    n_pad = _round_up(n, math.lcm(tm, tk))

    # Hoisted feature transform (degenerate K=1 contraction): X @ W1, once.
    xw1 = (x @ w1).astype(jnp.float32)                                   # (n, hid)

    # Zero-padded, lane-dense operands. A is streamed twice -> bf16 halves HBM bytes.
    a_p = jnp.zeros((n_pad, n_pad), jnp.bfloat16).at[:n, :n].set(
        a_hat.astype(jnp.bfloat16))
    h_p = jnp.zeros((n_pad, F_PAD), jnp.float32).at[:n, :hid].set(xw1)
    b1_p = jnp.zeros((1, F_PAD), jnp.float32).at[:, :hid].set(jnp.reshape(b1, (1, hid)))
    w2_p = jnp.zeros((F_PAD, F_PAD), jnp.float32).at[:hid, :f_out].set(w2)
    b2_p = jnp.zeros((1, F_PAD), jnp.float32).at[:, :f_out].set(jnp.reshape(b2, (1, f_out)))

    # Pass 1: G = relu(A @ (X W1) + b1) @ W2
    g = _agg_pass(_layer1_kernel, a_p, h_p, [b1_p, w2_p],
                  n_pad=n_pad, tm=tm, tk=tk)

    # Pass 2: out = log_softmax(A @ G + b2), masked over padded lanes
    out_p = _agg_pass(
        functools.partial(_layer2_kernel, num_classes=f_out),
        a_p, g, [b2_p], n_pad=n_pad, tm=tm, tk=tk,
        transcendentals=n_pad * F_PAD)

    return out_p[:n, :f_out]


def build_normalized_adjacency(edge_index, num_nodes):
    """A_hat = D^{-1/2} (A + I) D^{-1/2}, dense (N, N) float32."""
    src = edge_index[0]
    dst = edge_index[1]
    adj = jnp.zeros((num_nodes, num_nodes), jnp.float32)
    adj = adj.at[dst, src].set(1.0)                     # edge j -> i aggregates x_j into i
    adj = adj + jnp.eye(num_nodes, dtype=jnp.float32)   # self-loops
    deg = jnp.sum(adj, axis=1)
    d_inv_sqrt = jnp.where(deg > 0, 1.0 / jnp.sqrt(deg), 0.0)
    return d_inv_sqrt[:, None] * adj * d_inv_sqrt[None, :]


def reference_forward(a_hat, x, w1, b1, w2, b2):
    """Pure-JAX reference for correctness checking."""
    h = a_hat @ (x @ w1) + jnp.reshape(b1, (1, -1))
    h = jnp.maximum(h, 0.0)
    h = a_hat @ (h @ w2) + jnp.reshape(b2, (1, -1))
    return jax.nn.log_softmax(h, axis=1)


if __name__ == "__main__":
    # Graph & node features from the module spec.
    edge_index = jnp.array([[0, 1, 2, 3], [1, 0, 3, 2]], dtype=jnp.int32)
    x = jnp.array([[-1.0], [0.0], [1.0], [2.0]], dtype=jnp.float32)       # (4, 1)
    num_nodes = x.shape[0]

    # Deterministic parameters: GCNConv(1,16) and GCNConv(16,2), with bias.
    key = jax.random.PRNGKey(0)
    k1, k2 = jax.random.split(key)
    in1, hid, out_f = 1, 16, 2
    w1 = jax.random.normal(k1, (in1, hid), jnp.float32) * (1.0 / math.sqrt(in1))
    b1 = jnp.zeros((1, hid), jnp.float32)
    w2 = jax.random.normal(k2, (hid, out_f), jnp.float32) * (1.0 / math.sqrt(hid))
    b2 = jnp.zeros((1, out_f), jnp.float32)

    a_hat = build_normalized_adjacency(edge_index, num_nodes)

    out_kernel = jax.block_until_ready(
        gcn_forward(a_hat, x, w1, b1, w2, b2, tm=128, tk=128))

    # Reference uses the same bf16-quantized adjacency that the kernel streams.
    a_q = a_hat.astype(jnp.bfloat16).astype(jnp.float32)
    out_ref = reference_forward(a_q, x, w1, b1, w2, b2)
    assert out_kernel.shape == (num_nodes, out_f)
    assert jnp.allclose(out_kernel, out_ref, atol=1e-4, rtol=1e-4), float(
        jnp.max(jnp.abs(out_kernel - out_ref)))

    # Larger random graph: exercises the multi-tile grid / K-accumulation path
    # (n=300 -> n_pad=384 -> grid (3, 3) at tm=tk=128).
    n2 = 300
    kg, ke, kx2 = jax.random.split(jax.random.PRNGKey(1), 3)
    src = jax.random.randint(kg, (600,), 0, n2, dtype=jnp.int32)
    dst = jax.random.randint(ke, (600,), 0, n2, dtype=jnp.int32)
    edge_index2 = jnp.stack([src, dst])
    x2 = jax.random.normal(kx2, (n2, 1), jnp.float32)
    a2 = build_normalized_adjacency(edge_index2, n2)

    out2 = jax.block_until_ready(
        gcn_forward(a2, x2, w1, b1, w2, b2, tm=128, tk=128))
    ref2 = reference_forward(a2.astype(jnp.bfloat16).astype(jnp.float32),
                             x2, w1, b1, w2, b2)
    assert out2.shape == (n2, out_f)
    assert jnp.allclose(out2, ref2, atol=1e-4, rtol=1e-4), float(
        jnp.max(jnp.abs(out2 - ref2)))

    print("KERNEL_OK")
</pallas_src>

<mosaic_0001>
module attributes {stable_mosaic.version = 11 : i64} {
  func.func @_layer1_kernel(%arg0: i32, %arg1: i32, %arg2: memref<128x128xbf16, #tpu.memory_space<vmem>>, %arg3: memref<128x128xf32, #tpu.memory_space<vmem>>, %arg4: memref<1x128xf32, #tpu.memory_space<vmem>>, %arg5: memref<128x128xf32, #tpu.memory_space<vmem>>, %arg6: memref<128x128xf32, #tpu.memory_space<vmem>>, %arg7: memref<128x128xf32, #tpu.memory_space<vmem>>) attributes {dimension_semantics = [#tpu.dimension_semantics<parallel>, #tpu.dimension_semantics<arbitrary>], iteration_bounds = array<i64: 1, 1>, scalar_prefetch = 0 : i64, scratch_operands = 1 : i64, tpu.core_type = #tpu.core_type<tc>, window_params = [{transform_indices = @transform_0, window_bounds = array<i64: 128, 128>}, {transform_indices = @transform_1, window_bounds = array<i64: 128, 128>}, {pipeline_mode = #tpu.pipeline_mode<synchronous>, transform_indices = @transform_2, window_bounds = array<i64: 1, 128>}, {pipeline_mode = #tpu.pipeline_mode<synchronous>, transform_indices = @transform_3, window_bounds = array<i64: 128, 128>}, {transform_indices = @transform_4, window_bounds = array<i64: 128, 128>}]} {
    %c0_i32 = arith.constant 0 : i32
    %0 = arith.cmpi eq, %arg1, %c0_i32 : i32
    %1 = arith.extui %0 : i1 to i32
    %c0_i32_0 = arith.constant 0 : i32
    %2 = arith.cmpi ne, %1, %c0_i32_0 : i32
    scf.if %2 {
      %cst_10 = arith.constant 0.000000e+00 : f32
      %13 = vector.broadcast %cst_10 : f32 to vector<128x128xf32>
      %c0_11 = arith.constant 0 : index
      %c0_12 = arith.constant 0 : index
      %14 = vector.load %arg7[%c0_11, %c0_12] : memref<128x128xf32, #tpu.memory_space<vmem>>, vector<128x128xf32>
      tpu.vector_store %arg7[%c0_11, %c0_12], %13 {strides = array<i32>} : memref<128x128xf32, #tpu.memory_space<vmem>>, vector<128x128xf32>,
    } else {
    }
    %c0 = arith.constant 0 : index
    %c0_1 = arith.constant 0 : index
    %3 = vector.load %arg2[%c0, %c0_1] : memref<128x128xbf16, #tpu.memory_space<vmem>>, vector<128x128xbf16>
    %4 = arith.extf %3 : vector<128x128xbf16> to vector<128x128xf32>
    %c0_2 = arith.constant 0 : index
    %c0_3 = arith.constant 0 : index
    %5 = vector.load %arg7[%c0_2, %c0_3] : memref<128x128xf32, #tpu.memory_space<vmem>>, vector<128x128xf32>
    %c0_4 = arith.constant 0 : index
    %c0_5 = arith.constant 0 : index
    %6 = vector.load %arg3[%c0_4, %c0_5] : memref<128x128xf32, #tpu.memory_space<vmem>>, vector<128x128xf32>
    %cst = arith.constant dense<0.000000e+00> : vector<128x128xf32>
    %7 = tpu.matmul %4, %6, %cst {dimension_numbers = #tpu.dot_dimension_numbers<[1], [0], [0], [1], [0, 0, 1, 1], [], []>} : vector<128x128xf32>, vector<128x128xf32>, vector<128x128xf32> -> vector<128x128xf32>
    %8 = arith.addf %5, %7 : vector<128x128xf32>
    %c0_6 = arith.constant 0 : index
    %c0_7 = arith.constant 0 : index
    %9 = vector.load %arg7[%c0_6, %c0_7] : memref<128x128xf32, #tpu.memory_space<vmem>>, vector<128x128xf32>
    tpu.vector_store %arg7[%c0_6, %c0_7], %8 {strides = array<i32>} : memref<128x128xf32, #tpu.memory_space<vmem>>, vector<128x128xf32>,
    %c0_i32_8 = arith.constant 0 : i32
    %10 = arith.cmpi eq, %arg1, %c0_i32_8 : i32
    %11 = arith.extui %10 : i1 to i32
    %c0_i32_9 = arith.constant 0 : i32
    %12 = arith.cmpi ne, %11, %c0_i32_9 : i32
    scf.if %12 {
      %c0_10 = arith.constant 0 : index
      %c0_11 = arith.constant 0 : index
      %13 = vector.load %arg7[%c0_10, %c0_11] : memref<128x128xf32, #tpu.memory_space<vmem>>, vector<128x128xf32>
      %c0_12 = arith.constant 0 : index
      %c0_13 = arith.constant 0 : index
      %14 = vector.load %arg4[%c0_12, %c0_13] : memref<1x128xf32, #tpu.memory_space<vmem>>, vector<1x128xf32>
      %15 = vector.broadcast %14 : vector<1x128xf32> to vector<128x128xf32>
      %16 = arith.addf %13, %15 : vector<128x128xf32>
      %cst_14 = arith.constant 0.000000e+00 : f32
      %17 = vector.broadcast %cst_14 : f32 to vector<128x128xf32>
      %18 = arith.maximumf %16, %17 : vector<128x128xf32>
      %c0_15 = arith.constant 0 : index
      %c0_16 = arith.constant 0 : index
      %19 = vector.load %arg5[%c0_15, %c0_16] : memref<128x128xf32, #tpu.memory_space<vmem>>, vector<128x128xf32>
      %cst_17 = arith.constant dense<0.000000e+00> : vector<128x128xf32>
      %20 = tpu.matmul %18, %19, %cst_17 {dimension_numbers = #tpu.dot_dimension_numbers<[1], [0], [0], [1], [0, 0, 1, 1], [], []>} : vector<128x128xf32>, vector<128x128xf32>, vector<128x128xf32> -> vector<128x128xf32>
      %c0_18 = arith.constant 0 : index
      %c0_19 = arith.constant 0 : index
      %21 = vector.load %arg6[%c0_18, %c0_19] : memref<128x128xf32, #tpu.memory_space<vmem>>, vector<128x128xf32>
      tpu.vector_store %arg6[%c0_18, %c0_19], %20 {strides = array<i32>} : memref<128x128xf32, #tpu.memory_space<vmem>>, vector<128x128xf32>,
    } else {
    }
    return
  }
  func.func @transform_0(%arg0: i32, %arg1: i32) -> (i32, i32) {
    %c0_i32 = arith.constant 0 : i32
    return %arg0, %arg1 : i32, i32
  }
  func.func @transform_1(%arg0: i32, %arg1: i32) -> (i32, i32) {
    %c0_i32 = arith.constant 0 : i32
    %c0_i32_0 = arith.constant 0 : i32
    return %arg1, %c0_i32 : i32, i32
  }
  func.func @transform_2(%arg0: i32, %arg1: i32) -> (i32, i32) {
    %c0_i32 = arith.constant 0 : i32
    %c0_i32_0 = arith.constant 0 : i32
    %c0_i32_1 = arith.constant 0 : i32
    return %c0_i32, %c0_i32_0 : i32, i32
  }
  func.func @transform_3(%arg0: i32, %arg1: i32) -> (i32, i32) {
    %c0_i32 = arith.constant 0 : i32
    %c0_i32_0 = arith.constant 0 : i32
    %c0_i32_1 = arith.constant 0 : i32
    return %c0_i32, %c0_i32_0 : i32, i32
  }
  func.func @transform_4(%arg0: i32, %arg1: i32) -> (i32, i32) {
    %c0_i32 = arith.constant 0 : i32
    %c0_i32_0 = arith.constant 0 : i32
    return %arg0, %c0_i32 : i32, i32
  }
}

</mosaic_0001>

<llo_original>
// kernel: tpu_custom_call.1
$region0: #{tpu_custom_call.1}
  #allocation0 [shape = 'u32[]', space=smem, size = 0x4, offset = 0x4, fixed_abs, tag = 'smem constant byte address 0x4 - core index']
  #allocation1 [shape = 'u32[144,128]{1,0:T(1,128)}', space=vmem, size = 0x12000, scoped, tag = 'internal scratch']
  #allocation2 [shape = 'f32[128,128]{1,0:T(8,128)}', space=vmem, size = 0x10000, scoped, tag = 'scratch operand']
  %s0 = inlined_call_operand.hbm [shape: bf16[128,128], index: 0, kind: input, shape index: {}]
  %s1 = inlined_call_operand.hbm [shape: f32[128,128], index: 1, kind: input, shape index: {}]
  %s2 = inlined_call_operand.vmem [shape: f32[1,128], index: 2, kind: input, shape index: {}]
  %s3 = inlined_call_operand.hbm [shape: f32[128,128], index: 3, kind: input, shape index: {}]
  %s4 = inlined_call_operand.hbm [shape: f32[128,128], index: 4, kind: output, shape index: {}]
  %s5 = sld [smem:[#allocation0]]
  $region46: #{tpu_custom_call.1} parent=0
    _
  %s7 = ssub.s32 1, %s5
  %s8 = scalar_select 0, %s7, %s5
  $region1: #{tpu_custom_call.1} parent=0
    #allocation3 [shape = 'u8[32768]{0}', space=vmem, size = 0x8000, scoped, tag = 'input window, operand 0, single buffered']
    #allocation4 [shape = 's32[1]{0}', space=sflag, size = 0x4, scoped, tag = 'scoped memory for tpu_custom_call.1']
    #allocation5 [shape = 's32[1]{0}', space=sflag, size = 0x4, scoped, tag = 'scoped memory for tpu_custom_call.1']
    #allocation6 [shape = 'u8[65536]{0}', space=vmem, size = 0x10000, scoped, tag = 'input window, operand 1, single buffered']
    #allocation7 [shape = 's32[1]{0}', space=sflag, size = 0x4, scoped, tag = 'scoped memory for tpu_custom_call.1']
    #allocation8 [shape = 'u8[65536]{0}', space=vmem, size = 0x10000, scoped, tag = 'input window, operand 3, single buffered']
    #allocation9 [shape = 'u8[65536]{0}', space=vmem, size = 0x10000, scoped, tag = 'output window, operand 0, single buffered']
    %9 = vsyncpa [#allocation4], 0
    %10 = vsyncpa [#allocation7], 0
    %11 = vsyncpa [#allocation5], 0
    // Predicated region
    $region2: #{tpu_custom_call.1} parent=1 // pred_check
      _
    $region3: #{tpu_custom_call.1} parent=1 // pred_check_branch
      %13 = sbr.rel (0) target = $region5
    $region4: #{tpu_custom_call.1} parent=1 // pred_region
      %s15 = ssub.s32 1024, 1024
      %16 = vsyncadd [#allocation4], %s15
      %s17 = sshll.u32 [#allocation3], 4
      %s18 = int_to_ptr.vmem [resolvable:$true] %s17
      %23 = dma.hbm_to_vmem [thread:$0]  %s0, 1024, %s18, [#allocation4], 64, 64, 4
    $region5: #{tpu_custom_call.1} parent=1 // pred_fallthru
      _
    // Predicated region
    $region6: #{tpu_custom_call.1} parent=1 // pred_check
      _
    $region7: #{tpu_custom_call.1} parent=1 // pred_check_branch
      %25 = sbr.rel (0) target = $region9
    $region8: #{tpu_custom_call.1} parent=1 // pred_region
      %s27 = ssub.s32 2048, 2048
      %28 = vsyncadd [#allocation7], %s27
      %s29 = sshll.u32 [#allocation6], 4
      %s30 = int_to_ptr.vmem [resolvable:$true] %s29
      %35 = dma.hbm_to_vmem [thread:$0]  %s1, 2048, %s30, [#allocation7], 128, 128, 8
    $region9: #{tpu_custom_call.1} parent=1 // pred_fallthru
      _
    // Predicated region
    $region10: #{tpu_custom_call.1} parent=1 // pred_check
      _
    $region11: #{tpu_custom_call.1} parent=1 // pred_check_branch
      %37 = sbr.rel (0) target = $region13
    $region12: #{tpu_custom_call.1} parent=1 // pred_region
      _
    $region13: #{tpu_custom_call.1} parent=1 // pred_fallthru
      _
    // Predicated region
    $region14: #{tpu_custom_call.1} parent=1 // pred_check
      _
    $region15: #{tpu_custom_call.1} parent=1 // pred_check_branch
      %39 = sbr.rel (0) target = $region17
    $region16: #{tpu_custom_call.1} parent=1 // pred_region
      %s41 = ssub.s32 2048, 2048
      %42 = vsyncadd [#allocation7], %s41
      %s43 = sshll.u32 [#allocation8], 4
      %s44 = int_to_ptr.vmem [resolvable:$true] %s43
      %49 = dma.hbm_to_vmem [thread:$0]  %s3, 2048, %s44, [#allocation7], 128, 128, 8
    $region17: #{tpu_custom_call.1} parent=1 // pred_fallthru
      _
    // Predicated region
    $region18: #{tpu_custom_call.1} parent=1 // pred_check
      _
    $region19: #{tpu_custom_call.1} parent=1 // pred_check_branch
      %51 = sbr.rel (0) target = $region21
    $region20: #{tpu_custom_call.1} parent=1 // pred_region
      %52 = dma.done [#allocation4], 1024
    $region21: #{tpu_custom_call.1} parent=1 // pred_fallthru
      _
    // Predicated region
    $region22: #{tpu_custom_call.1} parent=1 // pred_check
      _
    $region23: #{tpu_custom_call.1} parent=1 // pred_check_branch
      %54 = sbr.rel (0) target = $region25
    $region24: #{tpu_custom_call.1} parent=1 // pred_region
      %55 = dma.done [#allocation7], 2048
    $region25: #{tpu_custom_call.1} parent=1 // pred_fallthru
      _
    // Predicated region
    $region26: #{tpu_custom_call.1} parent=1 // pred_check
      _
    $region27: #{tpu_custom_call.1} parent=1 // pred_check_branch
      %57 = sbr.rel (0) target = $region29
    $region28: #{tpu_custom_call.1} parent=1 // pred_region
      %58 = dma.done [#allocation7], 2048
    $region29: #{tpu_custom_call.1} parent=1 // pred_fallthru
      _
    %p59 = scmp.eq.s32.totalorder 0, 0
    // Predicated region
    $region30: #{tpu_custom_call.1} parent=1 // pred_check
      %p60 = pneg %p59
    $region31: #{tpu_custom_call.1} parent=1 // pred_check_branch
      %62 = sbr.rel (%p60) target = $region33
    $region32: #{tpu_custom_call.1} parent=1 // pred_region
      %63 = vst [vmem:[#allocation2] sm:$0xff] 0.0
      %64 = vst [vmem:[#allocation2 + $0x8] sm:$0xff] 0.0
      %65 = vst [vmem:[#allocation2 + $0x10] sm:$0xff] 0.0
      %66 = vst [vmem:[#allocation2 + $0x18] sm:$0xff] 0.0
      %67 = vst [vmem:[#allocation2 + $0x20] sm:$0xff] 0.0
      %68 = vst [vmem:[#allocation2 + $0x28] sm:$0xff] 0.0
      %69 = vst [vmem:[#allocation2 + $0x30] sm:$0xff] 0.0
      %70 = vst [vmem:[#allocation2 + $0x38] sm:$0xff] 0.0
      %71 = vst [vmem:[#allocation2 + $0x40] sm:$0xff] 0.0
      %72 = vst [vmem:[#allocation2 + $0x48] sm:$0xff] 0.0
      %73 = vst [vmem:[#allocation2 + $0x50] sm:$0xff] 0.0
      %74 = vst [vmem:[#allocation2 + $0x58] sm:$0xff] 0.0
      %75 = vst [vmem:[#allocation2 + $0x60] sm:$0xff] 0.0
      %76 = vst [vmem:[#allocation2 + $0x68] sm:$0xff] 0.0
      %77 = vst [vmem:[#allocation2 + $0x70] sm:$0xff] 0.0
      %78 = vst [vmem:[#allocation2 + $0x78] sm:$0xff] 0.0
    $region33: #{tpu_custom_call.1} parent=1 // pred_fallthru
      _
    %v79 = vld [vmem:[#allocation3] sm:$0xf]
    %v80 = vld [vmem:[#allocation3 + $0x4] sm:$0xf]
    %v81 = vld [vmem:[#allocation3 + $0x8] sm:$0xf]
    %v82 = vld [vmem:[#allocation3 + $0xc] sm:$0xf]
    %v83 = vld [vmem:[#allocation3 + $0x10] sm:$0xf]
    %v84 = vld [vmem:[#allocation3 + $0x14] sm:$0xf]
    %v85 = vld [vmem:[#allocation3 + $0x18] sm:$0xf]
    %v86 = vld [vmem:[#allocation3 + $0x1c] sm:$0xf]
    %v87 = vld [vmem:[#allocation3 + $0x20] sm:$0xf]
    %v88 = vld [vmem:[#allocation3 + $0x24] sm:$0xf]
    %v89 = vld [vmem:[#allocation3 + $0x28] sm:$0xf]
    %v90 = vld [vmem:[#allocation3 + $0x2c] sm:$0xf]
    %v91 = vld [vmem:[#allocation3 + $0x30] sm:$0xf]
    %v92 = vld [vmem:[#allocation3 + $0x34] sm:$0xf]
    %v93 = vld [vmem:[#allocation3 + $0x38] sm:$0xf]
    %v94 = vld [vmem:[#allocation3 + $0x3c] sm:$0xf]
    %v95 = vunpack.c.l.bf16 %v79
    %v96 = vunpack.c.l.bf16 %v80
    %v97 = vunpack.c.l.bf16 %v81
    %v98 = vunpack.c.l.bf16 %v82
    %v99 = vunpack.c.l.bf16 %v83
    %v100 = vunpack.c.l.bf16 %v84
    %v101 = vunpack.c.l.bf16 %v85
    %v102 = vunpack.c.l.bf16 %v86
    %v103 = vunpack.c.l.bf16 %v87
    %v104 = vunpack.c.l.bf16 %v88
    %v105 = vunpack.c.l.bf16 %v89
    %v106 = vunpack.c.l.bf16 %v90
    %v107 = vunpack.c.l.bf16 %v91
    %v108 = vunpack.c.l.bf16 %v92
    %v109 = vunpack.c.l.bf16 %v93
    %v110 = vunpack.c.l.bf16 %v94
    %v111 = vld [vmem:[#allocation2] sm:$0xff]
    %v112 = vld [vmem:[#allocation2 + $0x8] sm:$0xff]
    %v113 = vld [vmem:[#allocation2 + $0x10] sm:$0xff]
    %v114 = vld [vmem:[#allocation2 + $0x18] sm:$0xff]
    %v115 = vld [vmem:[#allocation2 + $0x20] sm:$0xff]
    %v116 = vld [vmem:[#allocation2 + $0x28] sm:$0xff]
    %v117 = vld [vmem:[#allocation2 + $0x30] sm:$0xff]
    %v118 = vld [vmem:[#allocation2 + $0x38] sm:$0xff]
    %v119 = vld [vmem:[#allocation2 + $0x40] sm:$0xff]
    %v120 = vld [vmem:[#allocation2 + $0x48] sm:$0xff]
    %v121 = vld [vmem:[#allocation2 + $0x50] sm:$0xff]
    %v122 = vld [vmem:[#allocation2 + $0x58] sm:$0xff]
    %v123 = vld [vmem:[#allocation2 + $0x60] sm:$0xff]
    %v124 = vld [vmem:[#allocation2 + $0x68] sm:$0xff]
    %v125 = vld [vmem:[#allocation2 + $0x70] sm:$0xff]
    %v126 = vld [vmem:[#allocation2 + $0x78] sm:$0xff]
    %v127 = vld [vmem:[#allocation6] sm:$0xff]
    %v128 = vld [vmem:[#allocation6 + $0x8] sm:$0xff]
    %v129 = vld [vmem:[#allocation6 + $0x10] sm:$0xff]
    %v130 = vld [vmem:[#allocation6 + $0x18] sm:$0xff]
    %v131 = vld [vmem:[#allocation6 + $0x20] sm:$0xff]
    %v132 = vld [vmem:[#allocation6 + $0x28] sm:$0xff]
    %v133 = vld [vmem:[#allocation6 + $0x30] sm:$0xff]
    %v134 = vld [vmem:[#allocation6 + $0x38] sm:$0xff]
    %v135 = vld [vmem:[#allocation6 + $0x40] sm:$0xff]
    %v136 = vld [vmem:[#allocation6 + $0x48] sm:$0xff]
    %v137 = vld [vmem:[#allocation6 + $0x50] sm:$0xff]
    %v138 = vld [vmem:[#allocation6 + $0x58] sm:$0xff]
    %v139 = vld [vmem:[#allocation6 + $0x60] sm:$0xff]
    %v140 = vld [vmem:[#allocation6 + $0x68] sm:$0xff]
    %v141 = vld [vmem:[#allocation6 + $0x70] sm:$0xff]
    %v142 = vld [vmem:[#allocation6 + $0x78] sm:$0xff]
    %143 = vmatprep.subr.mxu0 0.0
    %144 = vmatpush1.msra.mxu0 %v142
    %145 = vmatprep.subr.mxu0 0.0
    %146 = vmatpush1.msra.mxu0 %v141
    %147 = vmatprep.subr.mxu0 0.0
    %148 = vmatpush1.msra.mxu0 %v140
    %149 = vmatprep.subr.mxu0 0.0
    %150 = vmatpush1.msra.mxu0 %v139
    %151 = vmatprep.subr.mxu0 0.0
    %152 = vmatpush1.msra.mxu0 %v138
    %153 = vmatprep.subr.mxu0 0.0
    %154 = vmatpush1.msra.mxu0 %v137
    %155 = vmatprep.subr.mxu0 0.0
    %156 = vmatpush1.msra.mxu0 %v136
    %157 = vmatprep.subr.mxu0 0.0
    %158 = vmatpush1.msra.mxu0 %v135
    %159 = vmatprep.subr.mxu0 0.0
    %160 = vmatpush1.msra.mxu0 %v134
    %161 = vmatprep.subr.mxu0 0.0
    %162 = vmatpush1.msra.mxu0 %v133
    %163 = vmatprep.subr.mxu0 0.0
    %164 = vmatpush1.msra.mxu0 %v132
    %165 = vmatprep.subr.mxu0 0.0
    %166 = vmatpush1.msra.mxu0 %v131
    %167 = vmatprep.subr.mxu0 0.0
    %168 = vmatpush1.msra.mxu0 %v130
    %169 = vmatprep.subr.mxu0 0.0
    %170 = vmatpush1.msra.mxu0 %v129
    %171 = vmatprep.subr.mxu0 0.0
    %172 = vmatpush1.msra.mxu0 %v128
    %173 = vmatprep.subr.mxu0 0.0
    %174 = vmatpush1.msra.mxu0 %v127
    %175 = vmatprep.subr.mxu0 0.0
    %176 = vmatpush2.msra.mxu0 0.0
    %177 = vmatprep.subr.mxu0 0.0
    %178 = vmatpush2.msra.mxu0 0.0
    %179 = vmatprep.subr.mxu0 0.0
    %180 = vmatpush2.msra.mxu0 0.0
    %181 = vmatprep.subr.mxu0 0.0
    %182 = vmatpush2.msra.mxu0 0.0
    %183 = vmatprep.subr.mxu0 0.0
    %184 = vmatpush2.msra.mxu0 0.0
    %185 = vmatprep.subr.mxu0 0.0
    %186 = vmatpush2.msra.mxu0 0.0
    %187 = vmatprep.subr.mxu0 0.0
    %188 = vmatpush2.msra.mxu0 0.0
    %189 = vmatprep.subr.mxu0 0.0
    %190 = vmatpush2.msra.mxu0 0.0
    %191 = vmatprep.subr.mxu0 0.0
    %192 = vmatpush2.msra.mxu0 0.0
    %193 = vmatprep.subr.mxu0 0.0
    %194 = vmatpush2.msra.mxu0 0.0
    %195 = vmatprep.subr.mxu0 0.0
    %196 = vmatpush2.msra.mxu0 0.0
    %197 = vmatprep.subr.mxu0 0.0
    %198 = vmatpush2.msra.mxu0 0.0
    %199 = vmatprep.subr.mxu0 0.0
    %200 = vmatpush2.msra.mxu0 0.0
    %201 = vmatprep.subr.mxu0 0.0
    %202 = vmatpush2.msra.mxu0 0.0
    %203 = vmatprep.subr.mxu0 0.0
    %204 = vmatpush2.msra.mxu0 0.0
    %205 = vmatprep.subr.mxu0 0.0
    %206 = vmatpush2.msra.mxu0 0.0
    %207 = vmatprep.mubr.f32.mxu0 0.0
    %208 = vmatmul.mubr.f32.gmra.mxu0 %v95
    %v209 = vpop.f32.mrf.mxu0
    %v210 = vadd.f32 0.0, %v209
    %v211 = vpop.f32.mrf.mxu0
    %212 = vmatprep.mubr.f32.mxu0 0.0
    %213 = vmatmul.mubr.f32.gmra.mxu0 %v96
    %v214 = vpop.f32.mrf.mxu0
    %v215 = vadd.f32 0.0, %v214
    %v216 = vpop.f32.mrf.mxu0
    %217 = vmatprep.mubr.f32.mxu0 0.0
    %218 = vmatmul.mubr.f32.gmra.mxu0 %v97
    %v219 = vpop.f32.mrf.mxu0
    %v220 = vadd.f32 0.0, %v219
    %v221 = vpop.f32.mrf.mxu0
    %222 = vmatprep.mubr.f32.mxu0 0.0
    %223 = vmatmul.mubr.f32.gmra.mxu0 %v98
    %v224 = vpop.f32.mrf.mxu0
    %v225 = vadd.f32 0.0, %v224
    %v226 = vpop.f32.mrf.mxu0
    %227 = vmatprep.mubr.f32.mxu0 0.0
    %228 = vmatmul.mubr.f32.gmra.mxu0 %v99
    %v229 = vpop.f32.mrf.mxu0
    %v230 = vadd.f32 0.0, %v229
    %v231 = vpop.f32.mrf.mxu0
    %232 = vmatprep.mubr.f32.mxu0 0.0
    %233 = vmatmul.mubr.f32.gmra.mxu0 %v100
    %v234 = vpop.f32.mrf.mxu0
    %v235 = vadd.f32 0.0, %v234
    %v236 = vpop.f32.mrf.mxu0
    %237 = vmatprep.mubr.f32.mxu0 0.0
    %238 = vmatmul.mubr.f32.gmra.mxu0 %v101
    %v239 = vpop.f32.mrf.mxu0
    %v240 = vadd.f32 0.0, %v239
    %v241 = vpop.f32.mrf.mxu0
    %242 = vmatprep.mubr.f32.mxu0 0.0
    %243 = vmatmul.mubr.f32.gmra.mxu0 %v102
    %v244 = vpop.f32.mrf.mxu0
    %v245 = vadd.f32 0.0, %v244
    %v246 = vpop.f32.mrf.mxu0
    %247 = vmatprep.mubr.f32.mxu0 0.0
    %248 = vmatmul.mubr.f32.gmra.mxu0 %v103
    %v249 = vpop.f32.mrf.mxu0
    %v250 = vadd.f32 0.0, %v249
    %v251 = vpop.f32.mrf.mxu0
    %252 = vmatprep.mubr.f32.mxu0 0.0
    %253 = vmatmul.mubr.f32.gmra.mxu0 %v104
    %v254 = vpop.f32.mrf.mxu0
    %v255 = vadd.f32 0.0, %v254
    %v256 = vpop.f32.mrf.mxu0
    %257 = vmatprep.mubr.f32.mxu0 0.0
    %258 = vmatmul.mubr.f32.gmra.mxu0 %v105
    %v259 = vpop.f32.mrf.mxu0
    %v260 = vadd.f32 0.0, %v259
    %v261 = vpop.f32.mrf.mxu0
    %262 = vmatprep.mubr.f32.mxu0 0.0
    %263 = vmatmul.mubr.f32.gmra.mxu0 %v106
    %v264 = vpop.f32.mrf.mxu0
    %v265 = vadd.f32 0.0, %v264
    %v266 = vpop.f32.mrf.mxu0
    %267 = vmatprep.mubr.f32.mxu0 0.0
    %268 = vmatmul.mubr.f32.gmra.mxu0 %v107
    %v269 = vpop.f32.mrf.mxu0
    %v270 = vadd.f32 0.0, %v269
    %v271 = vpop.f32.mrf.mxu0
    %272 = vmatprep.mubr.f32.mxu0 0.0
    %273 = vmatmul.mubr.f32.gmra.mxu0 %v108
    %v274 = vpop.f32.mrf.mxu0
    %v275 = vadd.f32 0.0, %v274
    %v276 = vpop.f32.mrf.mxu0
    %277 = vmatprep.mubr.f32.mxu0 0.0
    %278 = vmatmul.mubr.f32.gmra.mxu0 %v109
    %v279 = vpop.f32.mrf.mxu0
    %v280 = vadd.f32 0.0, %v279
    %v281 = vpop.f32.mrf.mxu0
    %282 = vmatprep.mubr.f32.mxu0 0.0
    %283 = vmatmul.mubr.f32.gmra.mxu0 %v110
    %v284 = vpop.f32.mrf.mxu0
    %v285 = vadd.f32 0.0, %v284
    %v286 = vpop.f32.mrf.mxu0
    %287 = vdwg.mxu0
    %v288 = vadd.f32 %v111, %v210
    %v289 = vadd.f32 %v112, %v215
    %v290 = vadd.f32 %v113, %v220
    %v291 = vadd.f32 %v114, %v225
    %v292 = vadd.f32 %v115, %v230
    %v293 = vadd.f32 %v116, %v235
    %v294 = vadd.f32 %v117, %v240
    %v295 = vadd.f32 %v118, %v245
    %v296 = vadd.f32 %v119, %v250
    %v297 = vadd.f32 %v120, %v255
    %v298 = vadd.f32 %v121, %v260
    %v299 = vadd.f32 %v122, %v265
    %v300 = vadd.f32 %v123, %v270
    %v301 = vadd.f32 %v124, %v275
    %v302 = vadd.f32 %v125, %v280
    %v303 = vadd.f32 %v126, %v285
    %304 = vst [vmem:[#allocation2] sm:$0xff] %v288
    %305 = vst [vmem:[#allocation2 + $0x8] sm:$0xff] %v289
    %306 = vst [vmem:[#allocation2 + $0x10] sm:$0xff] %v290
    %307 = vst [vmem:[#allocation2 + $0x18] sm:$0xff] %v291
    %308 = vst [vmem:[#allocation2 + $0x20] sm:$0xff] %v292
    %309 = vst [vmem:[#allocation2 + $0x28] sm:$0xff] %v293
    %310 = vst [vmem:[#allocation2 + $0x30] sm:$0xff] %v294
    %311 = vst [vmem:[#allocation2 + $0x38] sm:$0xff] %v295
    %312 = vst [vmem:[#allocation2 + $0x40] sm:$0xff] %v296
    %313 = vst [vmem:[#allocation2 + $0x48] sm:$0xff] %v297
    %314 = vst [vmem:[#allocation2 + $0x50] sm:$0xff] %v298
    %315 = vst [vmem:[#allocation2 + $0x58] sm:$0xff] %v299
    %316 = vst [vmem:[#allocation2 + $0x60] sm:$0xff] %v300
    %317 = vst [vmem:[#allocation2 + $0x68] sm:$0xff] %v301
    %318 = vst [vmem:[#allocation2 + $0x70] sm:$0xff] %v302
    %319 = vst [vmem:[#allocation2 + $0x78] sm:$0xff] %v303
    // Predicated region
    $region34: #{tpu_custom_call.1} parent=1 // pred_check
      %p320 = pneg %p59
    $region35: #{tpu_custom_call.1} parent=1 // pred_check_branch
      %322 = sbr.rel (%p320) target = $region37
    $region36: #{tpu_custom_call.1} parent=1 // pred_region
      %v323 = vld [vmem:[#allocation2] sm:$0xff]
      %v324 = vld [vmem:[#allocation2 + $0x8] sm:$0xff]
      %v325 = vld [vmem:[#allocation2 + $0x10] sm:$0xff]
      %v326 = vld [vmem:[#allocation2 + $0x18] sm:$0xff]
      %v327 = vld [vmem:[#allocation2 + $0x20] sm:$0xff]
      %v328 = vld [vmem:[#allocation2 + $0x28] sm:$0xff]
      %v329 = vld [vmem:[#allocation2 + $0x30] sm:$0xff]
      %v330 = vld [vmem:[#allocation2 + $0x38] sm:$0xff]
      %v331 = vld [vmem:[#allocation2 + $0x40] sm:$0xff]
      %v332 = vld [vmem:[#allocation2 + $0x48] sm:$0xff]
      %v333 = vld [vmem:[#allocation2 + $0x50] sm:$0xff]
      %v334 = vld [vmem:[#allocation2 + $0x58] sm:$0xff]
      %v335 = vld [vmem:[#allocation2 + $0x60] sm:$0xff]
      %v336 = vld [vmem:[#allocation2 + $0x68] sm:$0xff]
      %v337 = vld [vmem:[#allocation2 + $0x70] sm:$0xff]
      %v338 = vld [vmem:[#allocation2 + $0x78] sm:$0xff]
      %v339 = vld [vmem:[%s2] sm:$0x1]
      %v341 = vlaneseq
      %v342 = vshrl.u32 %v341, 7
      %v343 = vsub.s32 0, %v342
      %v344 = vrot.slane %v339, %v343
      %v346 = vadd.f32 %v323, %v344
      %v347 = vadd.f32 %v324, %v344
      %v348 = vadd.f32 %v325, %v344
      %v349 = vadd.f32 %v326, %v344
      %v350 = vadd.f32 %v327, %v344
      %v351 = vadd.f32 %v328, %v344
      %v352 = vadd.f32 %v329, %v344
      %v353 = vadd.f32 %v330, %v344
      %v354 = vadd.f32 %v331, %v344
      %v355 = vadd.f32 %v332, %v344
      %v356 = vadd.f32 %v333, %v344
      %v357 = vadd.f32 %v334, %v344
      %v358 = vadd.f32 %v335, %v344
      %v359 = vadd.f32 %v336, %v344
      %v360 = vadd.f32 %v337, %v344
      %v361 = vadd.f32 %v338, %v344
      %v362 = vmax.f32 %v346, 0.0
      %v363 = vmax.f32 %v347, 0.0
      %v364 = vmax.f32 %v348, 0.0
      %v365 = vmax.f32 %v349, 0.0
      %v366 = vmax.f32 %v350, 0.0
      %v367 = vmax.f32 %v351, 0.0
      %v368 = vmax.f32 %v352, 0.0
      %v369 = vmax.f32 %v353, 0.0
      %v370 = vmax.f32 %v354, 0.0
      %v371 = vmax.f32 %v355, 0.0
      %v372 = vmax.f32 %v356, 0.0
      %v373 = vmax.f32 %v357, 0.0
      %v374 = vmax.f32 %v358, 0.0
      %v375 = vmax.f32 %v359, 0.0
      %v376 = vmax.f32 %v360, 0.0
      %v377 = vmax.f32 %v361, 0.0
      %v378 = vld [vmem:[#allocation8] sm:$0xff]
      %v379 = vld [vmem:[#allocation8 + $0x8] sm:$0xff]
      %v380 = vld [vmem:[#allocation8 + $0x10] sm:$0xff]
      %v381 = vld [vmem:[#allocation8 + $0x18] sm:$0xff]
      %v382 = vld [vmem:[#allocation8 + $0x20] sm:$0xff]
      %v383 = vld [vmem:[#allocation8 + $0x28] sm:$0xff]
      %v384 = vld [vmem:[#allocation8 + $0x30] sm:$0xff]
      %v385 = vld [vmem:[#allocation8 + $0x38] sm:$0xff]
      %v386 = vld [vmem:[#allocation8 + $0x40] sm:$0xff]
      %v387 = vld [vmem:[#allocation8 + $0x48] sm:$0xff]
      %v388 = vld [vmem:[#allocation8 + $0x50] sm:$0xff]
      %v389 = vld [vmem:[#allocation8 + $0x58] sm:$0xff]
      %v390 = vld [vmem:[#allocation8 + $0x60] sm:$0xff]
      %v391 = vld [vmem:[#allocation8 + $0x68] sm:$0xff]
      %v392 = vld [vmem:[#allocation8 + $0x70] sm:$0xff]
      %v393 = vld [vmem:[#allocation8 + $0x78] sm:$0xff]
      %394 = vmatprep.subr.mxu0 0.0
      %395 = vmatpush1.msra.mxu0 %v393
      %396 = vmatprep.subr.mxu0 0.0
      %397 = vmatpush1.msra.mxu0 %v392
      %398 = vmatprep.subr.mxu0 0.0
      %399 = vmatpush1.msra.mxu0 %v391
      %400 = vmatprep.subr.mxu0 0.0
      %401 = vmatpush1.msra.mxu0 %v390
      %402 = vmatprep.subr.mxu0 0.0
      %403 = vmatpush1.msra.mxu0 %v389
      %404 = vmatprep.subr.mxu0 0.0
      %405 = vmatpush1.msra.mxu0 %v388
      %406 = vmatprep.subr.mxu0 0.0
      %407 = vmatpush1.msra.mxu0 %v387
      %408 = vmatprep.subr.mxu0 0.0
      %409 = vmatpush1.msra.mxu0 %v386
      %410 = vmatprep.subr.mxu0 0.0
      %411 = vmatpush1.msra.mxu0 %v385
      %412 = vmatprep.subr.mxu0 0.0
      %413 = vmatpush1.msra.mxu0 %v384
      %414 = vmatprep.subr.mxu0 0.0
      %415 = vmatpush1.msra.mxu0 %v383
      %416 = vmatprep.subr.mxu0 0.0
      %417 = vmatpush1.msra.mxu0 %v382
      %418 = vmatprep.subr.mxu0 0.0
      %419 = vmatpush1.msra.mxu0 %v381
      %420 = vmatprep.subr.mxu0 0.0
      %421 = vmatpush1.msra.mxu0 %v380
      %422 = vmatprep.subr.mxu0 0.0
      %423 = vmatpush1.msra.mxu0 %v379
      %424 = vmatprep.subr.mxu0 0.0
      %425 = vmatpush1.msra.mxu0 %v378
      %426 = vmatprep.subr.mxu0 0.0
      %427 = vmatpush2.msra.mxu0 0.0
      %428 = vmatprep.subr.mxu0 0.0
      %429 = vmatpush2.msra.mxu0 0.0
      %430 = vmatprep.subr.mxu0 0.0
      %431 = vmatpush2.msra.mxu0 0.0
      %432 = vmatprep.subr.mxu0 0.0
      %433 = vmatpush2.msra.mxu0 0.0
      %434 = vmatprep.subr.mxu0 0.0
      %435 = vmatpush2.msra.mxu0 0.0
      %436 = vmatprep.subr.mxu0 0.0
      %437 = vmatpush2.msra.mxu0 0.0
      %438 = vmatprep.subr.mxu0 0.0
      %439 = vmatpush2.msra.mxu0 0.0
      %440 = vmatprep.subr.mxu0 0.0
      %441 = vmatpush2.msra.mxu0 0.0
      %442 = vmatprep.subr.mxu0 0.0
      %443 = vmatpush2.msra.mxu0 0.0
      %444 = vmatprep.subr.mxu0 0.0
      %445 = vmatpush2.msra.mxu0 0.0
      %446 = vmatprep.subr.mxu0 0.0
      %447 = vmatpush2.msra.mxu0 0.0
      %448 = vmatprep.subr.mxu0 0.0
      %449 = vmatpush2.msra.mxu0 0.0
      %450 = vmatprep.subr.mxu0 0.0
      %451 = vmatpush2.msra.mxu0 0.0
      %452 = vmatprep.subr.mxu0 0.0
      %453 = vmatpush2.msra.mxu0 0.0
      %454 = vmatprep.subr.mxu0 0.0
      %455 = vmatpush2.msra.mxu0 0.0
      %456 = vmatprep.subr.mxu0 0.0
      %457 = vmatpush2.msra.mxu0 0.0
      %458 = vmatprep.mubr.f32.mxu0 0.0
      %459 = vmatmul.mubr.f32.gmra.mxu0 %v362
      %v460 = vpop.f32.mrf.mxu0
      %v461 = vadd.f32 0.0, %v460
      %v462 = vpop.f32.mrf.mxu0
      %463 = vmatprep.mubr.f32.mxu0 0.0
      %464 = vmatmul.mubr.f32.gmra.mxu0 %v363
      %v465 = vpop.f32.mrf.mxu0
      %v466 = vadd.f32 0.0, %v465
      %v467 = vpop.f32.mrf.mxu0
      %468 = vmatprep.mubr.f32.mxu0 0.0
      %469 = vmatmul.mubr.f32.gmra.mxu0 %v364
      %v470 = vpop.f32.mrf.mxu0
      %v471 = vadd.f32 0.0, %v470
      %v472 = vpop.f32.mrf.mxu0
      %473 = vmatprep.mubr.f32.mxu0 0.0
      %474 = vmatmul.mubr.f32.gmra.mxu0 %v365
      %v475 = vpop.f32.mrf.mxu0
      %v476 = vadd.f32 0.0, %v475
      %v477 = vpop.f32.mrf.mxu0
      %478 = vmatprep.mubr.f32.mxu0 0.0
      %479 = vmatmul.mubr.f32.gmra.mxu0 %v366
      %v480 = vpop.f32.mrf.mxu0
      %v481 = vadd.f32 0.0, %v480
      %v482 = vpop.f32.mrf.mxu0
      %483 = vmatprep.mubr.f32.mxu0 0.0
      %484 = vmatmul.mubr.f32.gmra.mxu0 %v367
      %v485 = vpop.f32.mrf.mxu0
      %v486 = vadd.f32 0.0, %v485
      %v487 = vpop.f32.mrf.mxu0
      %488 = vmatprep.mubr.f32.mxu0 0.0
      %489 = vmatmul.mubr.f32.gmra.mxu0 %v368
      %v490 = vpop.f32.mrf.mxu0
      %v491 = vadd.f32 0.0, %v490
      %v492 = vpop.f32.mrf.mxu0
      %493 = vmatprep.mubr.f32.mxu0 0.0
      %494 = vmatmul.mubr.f32.gmra.mxu0 %v369
      %v495 = vpop.f32.mrf.mxu0
      %v496 = vadd.f32 0.0, %v495
      %v497 = vpop.f32.mrf.mxu0
      %498 = vmatprep.mubr.f32.mxu0 0.0
      %499 = vmatmul.mubr.f32.gmra.mxu0 %v370
      %v500 = vpop.f32.mrf.mxu0
      %v501 = vadd.f32 0.0, %v500
      %v502 = vpop.f32.mrf.mxu0
      %503 = vmatprep.mubr.f32.mxu0 0.0
      %504 = vmatmul.mubr.f32.gmra.mxu0 %v371
      %v505 = vpop.f32.mrf.mxu0
      %v506 = vadd.f32 0.0, %v505
      %v507 = vpop.f32.mrf.mxu0
      %508 = vmatprep.mubr.f32.mxu0 0.0
      %509 = vmatmul.mubr.f32.gmra.mxu0 %v372
      %v510 = vpop.f32.mrf.mxu0
      %v511 = vadd.f32 0.0, %v510
      %v512 = vpop.f32.mrf.mxu0
      %513 = vmatprep.mubr.f32.mxu0 0.0
      %514 = vmatmul.mubr.f32.gmra.mxu0 %v373
      %v515 = vpop.f32.mrf.mxu0
      %v516 = vadd.f32 0.0, %v515
      %v517 = vpop.f32.mrf.mxu0
      %518 = vmatprep.mubr.f32.mxu0 0.0
      %519 = vmatmul.mubr.f32.gmra.mxu0 %v374
      %v520 = vpop.f32.mrf.mxu0
      %v521 = vadd.f32 0.0, %v520
      %v522 = vpop.f32.mrf.mxu0
      %523 = vmatprep.mubr.f32.mxu0 0.0
      %524 = vmatmul.mubr.f32.gmra.mxu0 %v375
      %v525 = vpop.f32.mrf.mxu0
      %v526 = vadd.f32 0.0, %v525
      %v527 = vpop.f32.mrf.mxu0
      %528 = vmatprep.mubr.f32.mxu0 0.0
      %529 = vmatmul.mubr.f32.gmra.mxu0 %v376
      %v530 = vpop.f32.mrf.mxu0
      %v531 = vadd.f32 0.0, %v530
      %v532 = vpop.f32.mrf.mxu0
      %533 = vmatprep.mubr.f32.mxu0 0.0
      %534 = vmatmul.mubr.f32.gmra.mxu0 %v377
      %v535 = vpop.f32.mrf.mxu0
      %v536 = vadd.f32 0.0, %v535
      %v537 = vpop.f32.mrf.mxu0
      %538 = vdwg.mxu0
      %539 = vst [vmem:[#allocation9] sm:$0xff] %v461
      %540 = vst [vmem:[#allocation9 + $0x8] sm:$0xff] %v466
      %541 = vst [vmem:[#allocation9 + $0x10] sm:$0xff] %v471
      %542 = vst [vmem:[#allocation9 + $0x18] sm:$0xff] %v476
      %543 = vst [vmem:[#allocation9 + $0x20] sm:$0xff] %v481
      %544 = vst [vmem:[#allocation9 + $0x28] sm:$0xff] %v486
      %545 = vst [vmem:[#allocation9 + $0x30] sm:$0xff] %v491
      %546 = vst [vmem:[#allocation9 + $0x38] sm:$0xff] %v496
      %547 = vst [vmem:[#allocation9 + $0x40] sm:$0xff] %v501
      %548 = vst [vmem:[#allocation9 + $0x48] sm:$0xff] %v506
      %549 = vst [vmem:[#allocation9 + $0x50] sm:$0xff] %v511
      %550 = vst [vmem:[#allocation9 + $0x58] sm:$0xff] %v516
      %551 = vst [vmem:[#allocation9 + $0x60] sm:$0xff] %v521
      %552 = vst [vmem:[#allocation9 + $0x68] sm:$0xff] %v526
      %553 = vst [vmem:[#allocation9 + $0x70] sm:$0xff] %v531
      %554 = vst [vmem:[#allocation9 + $0x78] sm:$0xff] %v536
    $region37: #{tpu_custom_call.1} parent=1 // pred_fallthru
      _
    // Predicated region
    $region38: #{tpu_custom_call.1} parent=1 // pred_check
      _
    $region39: #{tpu_custom_call.1} parent=1 // pred_check_branch
      %556 = sbr.rel (0) target = $region41
    $region40: #{tpu_custom_call.1} parent=1 // pred_region
      %s558 = ssub.s32 2048, 2048
      %559 = vsyncadd [#allocation5], %s558
      %s560 = sshll.u32 [#allocation9], 4
      %s561 = int_to_ptr.vmem [resolvable:$true] %s560
      %566 = dma.vmem_to_hbm [thread:$0]  %s561, 2048, %s4, [#allocation5], 128, 128, 8
    $region41: #{tpu_custom_call.1} parent=1 // pred_fallthru
      _
    // Predicated region
    $region42: #{tpu_custom_call.1} parent=1 // pred_check
      _
    $region43: #{tpu_custom_call.1} parent=1 // pred_check_branch
      %568 = sbr.rel (0) target = $region45
    $region44: #{tpu_custom_call.1} parent=1 // pred_region
      %569 = dma.done [#allocation5], 2048
    $region45: #{tpu_custom_call.1} parent=1 // pred_fallthru
      _
    %570 = vsyncpa [#allocation4], 1
    %571 = vsyncpa [#allocation7], 1
    %572 = vsyncpa [#allocation5], 1

</llo_original>
